<compile_context>
chip_gen: v7x
topology: tpu7x:2x2x1
jax: 0.10.0
libtpu: 0.0.40
codegen_flags: <defaults>
</compile_context>

<pallas_src>
import functools

import jax
import jax.numpy as jnp
from jax.experimental import pallas as pl
from jax.experimental.pallas import tpu as pltpu


def _matmul_bias_kernel(x_ref, w_ref, b_ref, o_ref):
    """Single-K-step fast path: one MXU matmul + bias, straight to output."""
    o_ref[...] = (
        jnp.dot(x_ref[...], w_ref[...], preferred_element_type=jnp.float32)
        + b_ref[...]
    ).astype(o_ref.dtype)


def _matmul_bias_kred_kernel(x_ref, w_ref, b_ref, o_ref, acc_ref):
    """One (tm, tn) output tile; K reduction runs over grid axis 2."""
    k = pl.program_id(2)

    @pl.when(k == 0)
    def _init():
        acc_ref[...] = jnp.zeros_like(acc_ref)

    acc_ref[...] += jnp.dot(
        x_ref[...], w_ref[...], preferred_element_type=jnp.float32
    )

    @pl.when(k == pl.num_programs(2) - 1)
    def _finalize():
        # Bias added exactly once per output tile; inner K loop stays pure
        # MXU + accumulate.
        o_ref[...] = (acc_ref[...] + b_ref[...]).astype(o_ref.dtype)


def _round_up(x, m):
    return ((x + m - 1) // m) * m


def _pick_div_tile(dim, candidates):
    """Largest candidate that divides dim (dim is already a multiple of 128)."""
    for c in candidates:
        if dim % c == 0:
            return min(dim, c)
    return dim


@functools.partial(jax.jit, static_argnames=("patch_size", "compute_dtype"))
def patch_embed(x, weight, bias, patch_size, compute_dtype=jnp.bfloat16):
    """ViT PatchEmbed forward.

    x:      (B, C, H, W)   NCHW activations (matches the PyTorch module)
    weight: (E, C, P, P)   Conv2d weight (OIHW)
    bias:   (E,)           Conv2d bias
    returns (B, num_patches, E) == proj(x).flatten(2).transpose(1, 2)
    """
    B, C, H, W = x.shape
    E = weight.shape[0]
    P = patch_size
    Hp, Wp = H // P, W // P
    num_patches = Hp * Wp

    # Patchify: (B, C, H, W) -> (B*num_patches, C*P*P), K ordered (c, ph, pw)
    # to match the OIHW conv-weight flatten.  Done inside the jitted wrapper
    # so it fuses with padding / bf16 cast into a single HBM pass.
    # TODO(synk): fold the patchify into the kernel via an x BlockSpec of
    # (1, C, P, W) indexed by (b, hp) plus an in-VMEM reorder, removing this
    # extra HBM round-trip of x; kept in the wrapper because the general 4-D
    # in-kernel transpose does not lower cleanly on all generations.
    xp = x.reshape(B, C, Hp, P, Wp, P)
    xp = jnp.transpose(xp, (0, 2, 4, 1, 3, 5))
    xp = xp.reshape(B * num_patches, C * P * P)

    # Weight (E, C, P, P) -> (K, E); for a frozen parameter this transpose
    # should be hoisted out of the hot path / done once at load time.
    w2d = weight.reshape(E, C * P * P).T
    b2d = bias.reshape(1, E).astype(jnp.float32)

    M, K = xp.shape
    N = E

    # Lane-dense padding (no-op for production ViT shapes: K = N = 768).
    K_pad = _round_up(K, 128)
    N_pad = _round_up(N, 128)

    # Tile sizes: big enough to amortize per-grid-step overhead on v5e/v6e,
    # small enough to fit v7x's 64 MiB (32 MiB scoped) VMEM with 2-deep
    # buffers (worst case here: ~3 MiB total).
    if M >= 512:
        tm = 512
    elif M >= 256:
        tm = 256
    else:
        tm = _round_up(M, 8)
    tn = _pick_div_tile(N_pad, (256, 128))
    tk = _pick_div_tile(K_pad, (512, 384, 256, 128))
    M_pad = _round_up(M, tm)

    if (M_pad, K_pad) != (M, K):
        xp = jnp.pad(xp, ((0, M_pad - M), (0, K_pad - K)))
    if (K_pad, N_pad) != (K, N):
        w2d = jnp.pad(w2d, ((0, K_pad - K), (0, N_pad - N)))
    if N_pad != N:
        b2d = jnp.pad(b2d, ((0, 0), (0, N_pad - N)))

    # bf16 operands for the MXU (accumulation stays f32 inside the kernel).
    xp = xp.astype(compute_dtype)
    w2d = w2d.astype(compute_dtype)

    n_k = K_pad // tk

    bytes_accessed = (
        M_pad * K_pad * xp.dtype.itemsize
        + K_pad * N_pad * w2d.dtype.itemsize
        + N_pad * 4
        + M_pad * N_pad * x.dtype.itemsize
    )
    cost = pl.CostEstimate(
        flops=2 * M * N * K, transcendentals=0, bytes_accessed=bytes_accessed
    )

    if n_k == 1:
        # Whole K fits one tile: 2-D grid, no accumulator scratch, no pl.when.
        out = pl.pallas_call(
            _matmul_bias_kernel,
            out_shape=jax.ShapeDtypeStruct((M_pad, N_pad), x.dtype),
            grid=(M_pad // tm, N_pad // tn),
            in_specs=[
                pl.BlockSpec((tm, K_pad), lambda i, j: (i, 0)),
                pl.BlockSpec((K_pad, tn), lambda i, j: (0, j)),
                pl.BlockSpec((1, tn), lambda i, j: (0, j)),
            ],
            out_specs=pl.BlockSpec((tm, tn), lambda i, j: (i, j)),
            compiler_params=pltpu.CompilerParams(
                dimension_semantics=("parallel", "parallel"),
                vmem_limit_bytes=32 * 1024 * 1024,
            ),
            cost_estimate=cost,
        )(xp, w2d, b2d)
    else:
        out = pl.pallas_call(
            _matmul_bias_kred_kernel,
            out_shape=jax.ShapeDtypeStruct((M_pad, N_pad), x.dtype),
            grid=(M_pad // tm, N_pad // tn, n_k),
            in_specs=[
                pl.BlockSpec((tm, tk), lambda i, j, k: (i, k)),
                pl.BlockSpec((tk, tn), lambda i, j, k: (k, j)),
                pl.BlockSpec((1, tn), lambda i, j, k: (0, j)),
            ],
            out_specs=pl.BlockSpec((tm, tn), lambda i, j, k: (i, j)),
            scratch_shapes=[pltpu.VMEM((tm, tn), jnp.float32)],
            compiler_params=pltpu.CompilerParams(
                dimension_semantics=("parallel", "parallel", "arbitrary"),
                vmem_limit_bytes=32 * 1024 * 1024,
            ),
            cost_estimate=cost,
        )(xp, w2d, b2d)

    out = out[:M, :N]
    return out.reshape(B, num_patches, E)


if __name__ == "__main__":
    # Small config consistent with the module: img_size=16, patch_size=4,
    # in_chans=4, embed_dim=32, batch=2  ->  num_patches = 16.
    B, C, IMG, P, E = 2, 4, 16, 4, 32

    key = jax.random.PRNGKey(0)
    kx, kw, kb = jax.random.split(key, 3)
    x = jax.random.normal(kx, (B, C, IMG, IMG), dtype=jnp.float32)
    weight = jax.random.normal(kw, (E, C, P, P), dtype=jnp.float32) * 0.02
    bias = jax.random.normal(kb, (E,), dtype=jnp.float32) * 0.02

    # Reference: lax conv with stride == kernel (same semantics as nn.Conv2d),
    # then flatten(2).transpose(1, 2).
    ref = jax.lax.conv_general_dilated(
        x, weight, window_strides=(P, P), padding="VALID",
        dimension_numbers=("NCHW", "OIHW", "NCHW"))
    ref = ref + bias.reshape(1, E, 1, 1)
    ref = ref.reshape(B, E, -1).transpose(0, 2, 1)

    # f32 MXU path: tight-tolerance correctness check.
    out_f32 = jax.block_until_ready(
        patch_embed(x, weight, bias, P, compute_dtype=jnp.float32))
    assert out_f32.shape == (B, (IMG // P) * (IMG // P), E)
    assert jnp.allclose(out_f32, ref, atol=1e-4, rtol=1e-4)

    # Default bf16 MXU path (f32 accumulation): loose tolerance.
    out = jax.block_until_ready(patch_embed(x, weight, bias, P))
    assert out.shape == (B, (IMG // P) * (IMG // P), E)
    assert jnp.allclose(out, ref, atol=1e-2, rtol=1e-2)

    print("KERNEL_OK")
</pallas_src>

<mosaic_0001>
module attributes {stable_mosaic.version = 11 : i64} {
  func.func @_matmul_bias_kernel(%arg0: i32, %arg1: i32, %arg2: memref<32x128xf32, #tpu.memory_space<vmem>>, %arg3: memref<128x128xf32, #tpu.memory_space<vmem>>, %arg4: memref<1x128xf32, #tpu.memory_space<vmem>>, %arg5: memref<32x128xf32, #tpu.memory_space<vmem>>) attributes {dimension_semantics = [#tpu.dimension_semantics<parallel>, #tpu.dimension_semantics<parallel>], iteration_bounds = array<i64: 1, 1>, scalar_prefetch = 0 : i64, scratch_operands = 0 : i64, tpu.core_type = #tpu.core_type<tc>, window_params = [{transform_indices = @transform_0, window_bounds = array<i64: 32, 128>}, {transform_indices = @transform_1, window_bounds = array<i64: 128, 128>}, {transform_indices = @transform_2, window_bounds = array<i64: 1, 128>}, {transform_indices = @transform_3, window_bounds = array<i64: 32, 128>}]} {
    %c0 = arith.constant 0 : index
    %c0_0 = arith.constant 0 : index
    %0 = vector.load %arg2[%c0, %c0_0] : memref<32x128xf32, #tpu.memory_space<vmem>>, vector<32x128xf32>
    %c0_1 = arith.constant 0 : index
    %c0_2 = arith.constant 0 : index
    %1 = vector.load %arg3[%c0_1, %c0_2] : memref<128x128xf32, #tpu.memory_space<vmem>>, vector<128x128xf32>
    %cst = arith.constant dense<0.000000e+00> : vector<32x128xf32>
    %2 = tpu.matmul %0, %1, %cst {dimension_numbers = #tpu.dot_dimension_numbers<[1], [0], [0], [1], [0, 0, 1, 1], [], []>} : vector<32x128xf32>, vector<128x128xf32>, vector<32x128xf32> -> vector<32x128xf32>
    %c0_3 = arith.constant 0 : index
    %c0_4 = arith.constant 0 : index
    %3 = vector.load %arg4[%c0_3, %c0_4] : memref<1x128xf32, #tpu.memory_space<vmem>>, vector<1x128xf32>
    %4 = vector.broadcast %3 : vector<1x128xf32> to vector<32x128xf32>
    %5 = arith.addf %2, %4 : vector<32x128xf32>
    %c0_5 = arith.constant 0 : index
    %c0_6 = arith.constant 0 : index
    %6 = vector.load %arg5[%c0_5, %c0_6] : memref<32x128xf32, #tpu.memory_space<vmem>>, vector<32x128xf32>
    tpu.vector_store %arg5[%c0_5, %c0_6], %5 {strides = array<i32>} : memref<32x128xf32, #tpu.memory_space<vmem>>, vector<32x128xf32>,
    return
  }
  func.func @transform_0(%arg0: i32, %arg1: i32) -> (i32, i32) {
    %c0_i32 = arith.constant 0 : i32
    %c0_i32_0 = arith.constant 0 : i32
    return %arg0, %c0_i32 : i32, i32
  }
  func.func @transform_1(%arg0: i32, %arg1: i32) -> (i32, i32) {
    %c0_i32 = arith.constant 0 : i32
    %c0_i32_0 = arith.constant 0 : i32
    return %c0_i32, %arg1 : i32, i32
  }
  func.func @transform_2(%arg0: i32, %arg1: i32) -> (i32, i32) {
    %c0_i32 = arith.constant 0 : i32
    %c0_i32_0 = arith.constant 0 : i32
    return %c0_i32, %arg1 : i32, i32
  }
  func.func @transform_3(%arg0: i32, %arg1: i32) -> (i32, i32) {
    %c0_i32 = arith.constant 0 : i32
    return %arg0, %arg1 : i32, i32
  }
}

</mosaic_0001>

<llo_original>
// kernel: patch_embed.1
$region0: #{patch_embed.1}
  #allocation0 [shape = 'u32[]', space=smem, size = 0x4, offset = 0x4, fixed_abs, tag = 'smem constant byte address 0x4 - core index']
  #allocation1 [shape = 'u32[144,128]{1,0:T(1,128)}', space=vmem, size = 0x12000, scoped, tag = 'internal scratch']
  %s0 = inlined_call_operand.vmem [shape: f32[32,128], index: 0, kind: input, shape index: {}]
  %s1 = inlined_call_operand.vmem [shape: f32[128,128], index: 1, kind: input, shape index: {}]
  %s2 = inlined_call_operand.vmem [shape: f32[1,128], index: 2, kind: input, shape index: {}]
  %s3 = inlined_call_operand.hbm [shape: f32[32,128], index: 3, kind: output, shape index: {}]
  %s4 = sld [smem:[#allocation0]]
  $region22: #{patch_embed.1} parent=0
    _
  %s6 = ssub.s32 1, %s4
  %s7 = scalar_select 0, %s6, %s4
  $region1: #{patch_embed.1} parent=0
    #allocation2 [shape = 'u8[16384]{0}', space=vmem, size = 0x4000, scoped, tag = 'output window, operand 0, single buffered']
    #allocation3 [shape = 's32[1]{0}', space=sflag, size = 0x4, scoped, tag = 'scoped memory for patch_embed.1']
    %8 = vsyncpa [#allocation3], 0
    // Predicated region
    $region2: #{patch_embed.1} parent=1 // pred_check
      _
    $region3: #{patch_embed.1} parent=1 // pred_check_branch
      %10 = sbr.rel (0) target = $region5
    $region4: #{patch_embed.1} parent=1 // pred_region
      _
    $region5: #{patch_embed.1} parent=1 // pred_fallthru
      _
    // Predicated region
    $region6: #{patch_embed.1} parent=1 // pred_check
      _
    $region7: #{patch_embed.1} parent=1 // pred_check_branch
      %12 = sbr.rel (0) target = $region9
    $region8: #{patch_embed.1} parent=1 // pred_region
      _
    $region9: #{patch_embed.1} parent=1 // pred_fallthru
      _
    // Predicated region
    $region10: #{patch_embed.1} parent=1 // pred_check
      _
    $region11: #{patch_embed.1} parent=1 // pred_check_branch
      %14 = sbr.rel (0) target = $region13
    $region12: #{patch_embed.1} parent=1 // pred_region
      _
    $region13: #{patch_embed.1} parent=1 // pred_fallthru
      _
    %v15 = vld [vmem:[%s0] sm:$0xff]
    %v16 = vld [vmem:[%s0 + $0x8] sm:$0xff]
    %v17 = vld [vmem:[%s0 + $0x10] sm:$0xff]
    %v18 = vld [vmem:[%s0 + $0x18] sm:$0xff]
    %v19 = vld [vmem:[%s1] sm:$0xff]
    %v20 = vld [vmem:[%s1 + $0x8] sm:$0xff]
    %v21 = vld [vmem:[%s1 + $0x10] sm:$0xff]
    %v22 = vld [vmem:[%s1 + $0x18] sm:$0xff]
    %v23 = vld [vmem:[%s1 + $0x20] sm:$0xff]
    %v24 = vld [vmem:[%s1 + $0x28] sm:$0xff]
    %v25 = vld [vmem:[%s1 + $0x30] sm:$0xff]
    %v26 = vld [vmem:[%s1 + $0x38] sm:$0xff]
    %v27 = vld [vmem:[%s1 + $0x40] sm:$0xff]
    %v28 = vld [vmem:[%s1 + $0x48] sm:$0xff]
    %v29 = vld [vmem:[%s1 + $0x50] sm:$0xff]
    %v30 = vld [vmem:[%s1 + $0x58] sm:$0xff]
    %v31 = vld [vmem:[%s1 + $0x60] sm:$0xff]
    %v32 = vld [vmem:[%s1 + $0x68] sm:$0xff]
    %v33 = vld [vmem:[%s1 + $0x70] sm:$0xff]
    %v34 = vld [vmem:[%s1 + $0x78] sm:$0xff]
    %v35 = vld [vmem:[%s2] sm:$0x1]
    %v37 = vlaneseq
    %v38 = vshrl.u32 %v37, 7
    %v39 = vsub.s32 0, %v38
    %v40 = vrot.slane %v35, %v39
    %42 = vmatprep.subr.mxu0 0.0
    %43 = vmatpush1.msra.mxu0 %v19
    %44 = vmatprep.subr.mxu0 0.0
    %45 = vmatpush1.msra.mxu0 %v20
    %46 = vmatprep.subr.mxu0 0.0
    %47 = vmatpush1.msra.mxu0 %v21
    %48 = vmatprep.subr.mxu0 0.0
    %49 = vmatpush1.msra.mxu0 %v22
    %50 = vmatprep.subr.mxu0 0.0
    %51 = vmatpush1.msra.mxu0 %v23
    %52 = vmatprep.subr.mxu0 0.0
    %53 = vmatpush1.msra.mxu0 %v24
    %54 = vmatprep.subr.mxu0 0.0
    %55 = vmatpush1.msra.mxu0 %v25
    %56 = vmatprep.subr.mxu0 0.0
    %57 = vmatpush1.msra.mxu0 %v26
    %58 = vmatprep.subr.mxu0 0.0
    %59 = vmatpush1.msra.mxu0 %v27
    %60 = vmatprep.subr.mxu0 0.0
    %61 = vmatpush1.msra.mxu0 %v28
    %62 = vmatprep.subr.mxu0 0.0
    %63 = vmatpush1.msra.mxu0 %v29
    %64 = vmatprep.subr.mxu0 0.0
    %65 = vmatpush1.msra.mxu0 %v30
    %66 = vmatprep.subr.mxu0 0.0
    %67 = vmatpush1.msra.mxu0 %v31
    %68 = vmatprep.subr.mxu0 0.0
    %69 = vmatpush1.msra.mxu0 %v32
    %70 = vmatprep.subr.mxu0 0.0
    %71 = vmatpush1.msra.mxu0 %v33
    %72 = vmatprep.subr.mxu0 0.0
    %73 = vmatpush1.msra.mxu0 %v34
    %74 = vmatprep.subr.mxu0 0.0
    %75 = vmatpush1.msra.mxu0 0.0
    %76 = vmatprep.subr.mxu0 0.0
    %77 = vmatpush1.msra.mxu0 0.0
    %78 = vmatprep.subr.mxu0 0.0
    %79 = vmatpush1.msra.mxu0 0.0
    %80 = vmatprep.subr.mxu0 0.0
    %81 = vmatpush1.msra.mxu0 0.0
    %82 = vmatprep.subr.mxu0 0.0
    %83 = vmatpush1.msra.mxu0 0.0
    %84 = vmatprep.subr.mxu0 0.0
    %85 = vmatpush1.msra.mxu0 0.0
    %86 = vmatprep.subr.mxu0 0.0
    %87 = vmatpush1.msra.mxu0 0.0
    %88 = vmatprep.subr.mxu0 0.0
    %89 = vmatpush1.msra.mxu0 0.0
    %90 = vmatprep.subr.mxu0 0.0
    %91 = vmatpush1.msra.mxu0 0.0
    %92 = vmatprep.subr.mxu0 0.0
    %93 = vmatpush1.msra.mxu0 0.0
    %94 = vmatprep.subr.mxu0 0.0
    %95 = vmatpush1.msra.mxu0 0.0
    %96 = vmatprep.subr.mxu0 0.0
    %97 = vmatpush1.msra.mxu0 0.0
    %98 = vmatprep.subr.mxu0 0.0
    %99 = vmatpush1.msra.mxu0 0.0
    %100 = vmatprep.subr.mxu0 0.0
    %101 = vmatpush1.msra.mxu0 0.0
    %102 = vmatprep.subr.mxu0 0.0
    %103 = vmatpush1.msra.mxu0 0.0
    %104 = vmatprep.subr.mxu0 0.0
    %105 = vmatpush1.msra.mxu0 0.0
    %106 = vmatprep.mubr.f32.mxu0 0.0
    %107 = vmatmul.mubr.f32.gmra.mrb[0].mxu0 %v15
    %v108 = vpop.f32.mrb[0].mxu0
    %v109 = vadd.f32 %v40, %v108
    %v110 = vpop.f32.mrb[0].mxu0
    %111 = vmatprep.mubr.f32.mxu0 0.0
    %112 = vmatmul.mubr.f32.gmra.mrb[0].mxu0 %v16
    %v113 = vpop.f32.mrb[0].mxu0
    %v114 = vadd.f32 %v40, %v113
    %v115 = vpop.f32.mrb[0].mxu0
    %116 = vmatprep.mubr.f32.mxu0 0.0
    %117 = vmatmul.mubr.f32.gmra.mrb[0].mxu0 %v17
    %v118 = vpop.f32.mrb[0].mxu0
    %v119 = vadd.f32 %v40, %v118
    %v120 = vpop.f32.mrb[0].mxu0
    %121 = vmatprep.mubr.f32.mxu0 0.0
    %122 = vmatmul.mubr.f32.gmra.mrb[0].mxu0 %v18
    %v123 = vpop.f32.mrb[0].mxu0
    %v124 = vadd.f32 %v40, %v123
    %v125 = vpop.f32.mrb[0].mxu0
    %126 = vdwg.mxu0
    %127 = vst [vmem:[#allocation2] sm:$0xff] %v109
    %128 = vst [vmem:[#allocation2 + $0x8] sm:$0xff] %v114
    %129 = vst [vmem:[#allocation2 + $0x10] sm:$0xff] %v119
    %130 = vst [vmem:[#allocation2 + $0x18] sm:$0xff] %v124
    // Predicated region
    $region14: #{patch_embed.1} parent=1 // pred_check
      _
    $region15: #{patch_embed.1} parent=1 // pred_check_branch
      %132 = sbr.rel (0) target = $region17
    $region16: #{patch_embed.1} parent=1 // pred_region
      %s134 = ssub.s32 512, 512
      %135 = vsyncadd [#allocation3], %s134
      %s136 = sshll.u32 [#allocation2], 4
      %s137 = int_to_ptr.vmem [resolvable:$true] %s136
      %142 = dma.vmem_to_hbm [thread:$0]  %s137, 512, %s3, [#allocation3], 128, 128, 8
    $region17: #{patch_embed.1} parent=1 // pred_fallthru
      _
    // Predicated region
    $region18: #{patch_embed.1} parent=1 // pred_check
      _
    $region19: #{patch_embed.1} parent=1 // pred_check_branch
      %144 = sbr.rel (0) target = $region21
    $region20: #{patch_embed.1} parent=1 // pred_region
      %145 = dma.done [#allocation3], 512
    $region21: #{patch_embed.1} parent=1 // pred_fallthru
      _
    %146 = vsyncpa [#allocation3], 1

</llo_original>
